<compile_context>
chip_gen: v7x
topology: tpu7x:2x2x1
jax: 0.10.0
libtpu: 0.0.40
codegen_flags: <defaults>
</compile_context>

<pallas_src>
import math

import jax
import jax.numpy as jnp
from jax.experimental import pallas as pl
from jax.experimental.pallas import tpu as pltpu


_TARGET_TILE_BYTES = 4 * 1024 * 1024   # ~4 MiB/tile; in+out double-buffered ~= 16 MiB live
_VMEM_LIMIT_BYTES = 32 * 1024 * 1024   # safe on v5e/v6e (128 MiB) and v7x (64 MiB physical)


def _dyt_rows_kernel(alpha_ref, x_ref, w_ref, b_ref, o_ref):
    # channels_last: x tile (TM, H'), w/b (1, H') resident.
    alpha = alpha_ref[0]
    x = x_ref[...].astype(jnp.float32)   # f32 compute; HBM traffic stays in input dtype
    w = w_ref[...].astype(jnp.float32)
    b = b_ref[...].astype(jnp.float32)
    y = jnp.tanh(alpha * x)
    o_ref[...] = (y * w + b).astype(o_ref.dtype)


def _dyt_cf_kernel(alpha_ref, x_ref, w_ref, b_ref, o_ref):
    # channels_first: x tile (1, C, TL), w/b (C, 1) resident.
    alpha = alpha_ref[0]
    x = x_ref[...].astype(jnp.float32)
    w = w_ref[...].astype(jnp.float32)[None]   # (1, C, 1)
    b = b_ref[...].astype(jnp.float32)[None]
    y = jnp.tanh(alpha * x)
    o_ref[...] = (y * w + b).astype(o_ref.dtype)


def dynamic_tanh(x, alpha, weight, bias, channels_last):
    """DynamicTanh forward.

    channels_last:  x (..., H), weight/bias (H,)   -> applied along last dim
    channels_first: x (B, C, L), weight/bias (C,)  -> applied along channel dim
    """
    alpha = jnp.asarray(alpha, jnp.float32).reshape((1,))
    itemsize = jnp.dtype(x.dtype).itemsize

    if channels_last:
        H = x.shape[-1]
        N = math.prod(x.shape[:-1])

        # Fold k consecutive rows into the lane dim when H is not 128-aligned so the
        # output block's last dim is a large multiple of 128 (unmasked vst).
        fold = 1
        if H % 128 != 0:
            k = 128 // math.gcd(H, 128)
            if N % k == 0:
                fold = k
        Hp = H * fold
        Np = N // fold

        x2 = x.reshape(Np, Hp)
        w2, b2 = weight, bias
        if fold > 1:
            w2 = jnp.tile(w2, fold)
            b2 = jnp.tile(b2, fold)
        w2 = w2.reshape(1, Hp)
        b2 = b2.reshape(1, Hp)

        # Row-tile size: ~4 MiB, multiple of 8 (sublane), or the full row count.
        row_bytes = Hp * itemsize
        tm = max(1, _TARGET_TILE_BYTES // row_bytes)
        tm = max(8, (tm // 8) * 8)
        tm = min(tm, Np)
        grid = (pl.cdiv(Np, tm),)

        out2 = pl.pallas_call(
            _dyt_rows_kernel,
            out_shape=jax.ShapeDtypeStruct((Np, Hp), x.dtype),
            grid=grid,
            in_specs=[
                pl.BlockSpec(memory_space=pltpu.SMEM),        # alpha scalar
                pl.BlockSpec((tm, Hp), lambda i: (i, 0)),     # x row tile
                pl.BlockSpec((1, Hp), lambda i: (0, 0)),      # weight (resident)
                pl.BlockSpec((1, Hp), lambda i: (0, 0)),      # bias (resident)
            ],
            out_specs=pl.BlockSpec((tm, Hp), lambda i: (i, 0)),
            compiler_params=pltpu.CompilerParams(
                dimension_semantics=("parallel",),
                vmem_limit_bytes=_VMEM_LIMIT_BYTES),
        )(alpha, x2, w2, b2)
        return out2.reshape(x.shape)

    # ---- channels_first: x (B, C, L), weight/bias (C,) ----
    B, C, L = x.shape
    if L % 128 == 0:
        tl = max(128, (_TARGET_TILE_BYTES // max(1, C * itemsize)) // 128 * 128)
        tl = min(tl, L)
    else:
        tl = L   # full last dim (small-L case); still correct, just lane-sparse
    grid = (B, pl.cdiv(L, tl))

    w2 = weight.reshape(C, 1)
    b2 = bias.reshape(C, 1)

    return pl.pallas_call(
        _dyt_cf_kernel,
        out_shape=jax.ShapeDtypeStruct(x.shape, x.dtype),
        grid=grid,
        in_specs=[
            pl.BlockSpec(memory_space=pltpu.SMEM),                 # alpha scalar
            pl.BlockSpec((1, C, tl), lambda b, j: (b, 0, j)),      # x tile
            pl.BlockSpec((C, 1), lambda b, j: (0, 0)),             # weight (resident)
            pl.BlockSpec((C, 1), lambda b, j: (0, 0)),             # bias (resident)
        ],
        out_specs=pl.BlockSpec((1, C, tl), lambda b, j: (b, 0, j)),
        compiler_params=pltpu.CompilerParams(
            dimension_semantics=("parallel", "parallel"),
            vmem_limit_bytes=_VMEM_LIMIT_BYTES),
    )(alpha, x, w2, b2)


def _ref_dynamic_tanh(x, alpha, weight, bias, channels_last):
    y = jnp.tanh(alpha * x)
    if channels_last:
        return y * weight + bias
    return y * weight[None, :, None] + bias[None, :, None]


if __name__ == "__main__":
    key = jax.random.PRNGKey(0)
    k1, k2, k3, k4, k5 = jax.random.split(key, 5)
    alpha = jnp.float32(0.5)   # alpha_init_value

    # ---- channels_last small: x (B, S, H) = (2, 8, 32); H=32 folds 4x -> lane width 128 ----
    B, S, H = 2, 8, 32
    x_cl = jax.random.normal(k1, (B, S, H), dtype=jnp.float32)
    w_cl = jnp.ones((H,), jnp.float32) + 0.01 * jax.random.normal(k2, (H,), jnp.float32)
    b_cl = 0.01 * jax.random.normal(k3, (H,), jnp.float32)
    out_cl = dynamic_tanh(x_cl, alpha, w_cl, b_cl, channels_last=True)
    jax.block_until_ready(out_cl)
    ref_cl = _ref_dynamic_tanh(x_cl, alpha, w_cl, b_cl, True)
    assert jnp.allclose(out_cl, ref_cl, atol=1e-5, rtol=1e-5)

    # ---- channels_first small: x (B, C, L) = (2, 4, 16) ----
    Bc, C, L = 2, 4, 16
    x_cf = jax.random.normal(k4, (Bc, C, L), dtype=jnp.float32)
    w_cf = jnp.ones((C,), jnp.float32) * 1.1
    b_cf = jnp.full((C,), 0.05, jnp.float32)
    out_cf = dynamic_tanh(x_cf, alpha, w_cf, b_cf, channels_last=False)
    jax.block_until_ready(out_cf)
    ref_cf = _ref_dynamic_tanh(x_cf, alpha, w_cf, b_cf, False)
    assert jnp.allclose(out_cf, ref_cf, atol=1e-5, rtol=1e-5)

    # ---- channels_last moderate: exercises multi-step row-tiled grid (2 pipeline steps) ----
    Bm, Sm, Hm = 4, 1024, 512
    x_m = jax.random.normal(k5, (Bm, Sm, Hm), dtype=jnp.float32)
    w_m = jnp.ones((Hm,), jnp.float32)
    b_m = jnp.zeros((Hm,), jnp.float32)
    out_m = dynamic_tanh(x_m, alpha, w_m, b_m, channels_last=True)
    jax.block_until_ready(out_m)
    ref_m = _ref_dynamic_tanh(x_m, alpha, w_m, b_m, True)
    assert jnp.allclose(out_m, ref_m, atol=1e-5, rtol=1e-5)

    # ---- bf16 HBM I/O (f32 compute in-kernel, bf16 store) ----
    x_bf = x_cl.astype(jnp.bfloat16)
    out_bf = dynamic_tanh(x_bf, alpha,
                          w_cl.astype(jnp.bfloat16), b_cl.astype(jnp.bfloat16),
                          channels_last=True)
    jax.block_until_ready(out_bf)
    ref_bf = _ref_dynamic_tanh(x_bf.astype(jnp.float32), alpha, w_cl, b_cl, True)
    assert jnp.allclose(out_bf.astype(jnp.float32), ref_bf, atol=2e-2, rtol=2e-2)

    print("KERNEL_OK")
</pallas_src>

<mosaic_0001>
module attributes {stable_mosaic.version = 11 : i64} {
  func.func @_dyt_rows_kernel(%arg0: i32, %arg1: memref<1xf32, #tpu.memory_space<smem>>, %arg2: memref<4x128xf32, #tpu.memory_space<vmem>>, %arg3: memref<1x128xf32, #tpu.memory_space<vmem>>, %arg4: memref<1x128xf32, #tpu.memory_space<vmem>>, %arg5: memref<4x128xf32, #tpu.memory_space<vmem>>) attributes {dimension_semantics = [#tpu.dimension_semantics<parallel>], iteration_bounds = array<i64: 1>, scalar_prefetch = 0 : i64, scratch_operands = 0 : i64, tpu.core_type = #tpu.core_type<tc>, window_params = [{transform_indices = @transform_0, window_bounds = array<i64: 1>}, {transform_indices = @transform_1, window_bounds = array<i64: 4, 128>}, {pipeline_mode = #tpu.pipeline_mode<synchronous>, transform_indices = @transform_2, window_bounds = array<i64: 1, 128>}, {pipeline_mode = #tpu.pipeline_mode<synchronous>, transform_indices = @transform_3, window_bounds = array<i64: 1, 128>}, {transform_indices = @transform_4, window_bounds = array<i64: 4, 128>}]} {
    %c0 = arith.constant 0 : index
    %0 = memref.load %arg1[%c0] : memref<1xf32, #tpu.memory_space<smem>>
    %c0_0 = arith.constant 0 : index
    %c0_1 = arith.constant 0 : index
    %1 = vector.load %arg2[%c0_0, %c0_1] : memref<4x128xf32, #tpu.memory_space<vmem>>, vector<4x128xf32>
    %c0_2 = arith.constant 0 : index
    %c0_3 = arith.constant 0 : index
    %2 = vector.load %arg3[%c0_2, %c0_3] : memref<1x128xf32, #tpu.memory_space<vmem>>, vector<1x128xf32>
    %c0_4 = arith.constant 0 : index
    %c0_5 = arith.constant 0 : index
    %3 = vector.load %arg4[%c0_4, %c0_5] : memref<1x128xf32, #tpu.memory_space<vmem>>, vector<1x128xf32>
    %4 = vector.broadcast %0 : f32 to vector<4x128xf32>
    %5 = arith.mulf %4, %1 : vector<4x128xf32>
    %6 = math.tanh %5 : vector<4x128xf32>
    %7 = vector.broadcast %2 : vector<1x128xf32> to vector<4x128xf32>
    %8 = arith.mulf %6, %7 : vector<4x128xf32>
    %9 = vector.broadcast %3 : vector<1x128xf32> to vector<4x128xf32>
    %10 = arith.addf %8, %9 : vector<4x128xf32>
    %c0_6 = arith.constant 0 : index
    %c0_7 = arith.constant 0 : index
    %11 = vector.load %arg5[%c0_6, %c0_7] : memref<4x128xf32, #tpu.memory_space<vmem>>, vector<4x128xf32>
    tpu.vector_store %arg5[%c0_6, %c0_7], %10 {strides = array<i32>} : memref<4x128xf32, #tpu.memory_space<vmem>>, vector<4x128xf32>,
    return
  }
  func.func @transform_0(%arg0: i32) -> i32 {
    %c0_i32 = arith.constant 0 : i32
    %c0_i32_0 = arith.constant 0 : i32
    return %c0_i32 : i32
  }
  func.func @transform_1(%arg0: i32) -> (i32, i32) {
    %c0_i32 = arith.constant 0 : i32
    %c0_i32_0 = arith.constant 0 : i32
    return %arg0, %c0_i32 : i32, i32
  }
  func.func @transform_2(%arg0: i32) -> (i32, i32) {
    %c0_i32 = arith.constant 0 : i32
    %c0_i32_0 = arith.constant 0 : i32
    %c0_i32_1 = arith.constant 0 : i32
    return %c0_i32, %c0_i32_0 : i32, i32
  }
  func.func @transform_3(%arg0: i32) -> (i32, i32) {
    %c0_i32 = arith.constant 0 : i32
    %c0_i32_0 = arith.constant 0 : i32
    %c0_i32_1 = arith.constant 0 : i32
    return %c0_i32, %c0_i32_0 : i32, i32
  }
  func.func @transform_4(%arg0: i32) -> (i32, i32) {
    %c0_i32 = arith.constant 0 : i32
    %c0_i32_0 = arith.constant 0 : i32
    return %arg0, %c0_i32 : i32, i32
  }
}

</mosaic_0001>

<llo_original>
// kernel: tpu_custom_call.1
$region0: #{tpu_custom_call.1}
  #allocation0 [shape = 'u32[]', space=smem, size = 0x4, offset = 0x4, fixed_abs, tag = 'smem constant byte address 0x4 - core index']
  #allocation1 [shape = 'u32[144,128]{1,0:T(1,128)}', space=vmem, size = 0x12000, scoped, tag = 'internal scratch']
  #allocation2 [shape = 'f32[1]{0:T(128)S(6)}', space=smem, size = 0x200, scoped, tag = 'scoped memory for tpu_custom_call.1']
  %s0 = inlined_call_operand.<no memory space> [shape: f32[1], index: 0, kind: input, shape index: {}]
  %s1 = inlined_call_operand.hbm [shape: f32[4,128], index: 1, kind: input, shape index: {}]
  %s2 = inlined_call_operand.vmem [shape: f32[1,128], index: 2, kind: input, shape index: {}]
  %s3 = inlined_call_operand.vmem [shape: f32[1,128], index: 3, kind: input, shape index: {}]
  %s4 = inlined_call_operand.hbm [shape: f32[4,128], index: 4, kind: output, shape index: {}]
  %s5 = sld [smem:[#allocation0]]
  $region30: #{tpu_custom_call.1} parent=0
    _
  %s7 = ssub.s32 1, %s5
  %s8 = scalar_select 0, %s7, %s5
  %9 = sst [smem:[#allocation2]] %s0
  $region1: #{tpu_custom_call.1} parent=0
    #allocation3 [shape = 'u8[2048]{0}', space=vmem, size = 0x800, scoped, tag = 'input window, operand 1, single buffered']
    #allocation4 [shape = 's32[1]{0}', space=sflag, size = 0x4, scoped, tag = 'scoped memory for tpu_custom_call.1']
    #allocation5 [shape = 's32[1]{0}', space=sflag, size = 0x4, scoped, tag = 'scoped memory for tpu_custom_call.1']
    #allocation6 [shape = 'u8[2048]{0}', space=vmem, size = 0x800, scoped, tag = 'output window, operand 0, single buffered']
    %10 = vsyncpa [#allocation4], 0
    %11 = vsyncpa [#allocation5], 0
    // Predicated region
    $region2: #{tpu_custom_call.1} parent=1 // pred_check
      _
    $region3: #{tpu_custom_call.1} parent=1 // pred_check_branch
      %13 = sbr.rel (0) target = $region5
    $region4: #{tpu_custom_call.1} parent=1 // pred_region
      _
    $region5: #{tpu_custom_call.1} parent=1 // pred_fallthru
      _
    // Predicated region
    $region6: #{tpu_custom_call.1} parent=1 // pred_check
      _
    $region7: #{tpu_custom_call.1} parent=1 // pred_check_branch
      %15 = sbr.rel (0) target = $region9
    $region8: #{tpu_custom_call.1} parent=1 // pred_region
      %s17 = ssub.s32 64, 64
      %18 = vsyncadd [#allocation4], %s17
      %s20 = sshll.u32 [#allocation3], 4
      %s21 = int_to_ptr.vmem [resolvable:$true] %s20
      %23 = dma.hbm_to_vmem [thread:$0]  %s1, 64, %s21, [#allocation4]
    $region9: #{tpu_custom_call.1} parent=1 // pred_fallthru
      _
    // Predicated region
    $region10: #{tpu_custom_call.1} parent=1 // pred_check
      _
    $region11: #{tpu_custom_call.1} parent=1 // pred_check_branch
      %25 = sbr.rel (0) target = $region13
    $region12: #{tpu_custom_call.1} parent=1 // pred_region
      _
    $region13: #{tpu_custom_call.1} parent=1 // pred_fallthru
      _
    // Predicated region
    $region14: #{tpu_custom_call.1} parent=1 // pred_check
      _
    $region15: #{tpu_custom_call.1} parent=1 // pred_check_branch
      %27 = sbr.rel (0) target = $region17
    $region16: #{tpu_custom_call.1} parent=1 // pred_region
      _
    $region17: #{tpu_custom_call.1} parent=1 // pred_fallthru
      _
    // Predicated region
    $region18: #{tpu_custom_call.1} parent=1 // pred_check
      _
    $region19: #{tpu_custom_call.1} parent=1 // pred_check_branch
      %29 = sbr.rel (0) target = $region21
    $region20: #{tpu_custom_call.1} parent=1 // pred_region
      %30 = dma.done [#allocation4], 64
    $region21: #{tpu_custom_call.1} parent=1 // pred_fallthru
      _
    %s31 = sld [smem:[#allocation2]]
    %v32 = vld [vmem:[#allocation3] sm:$0xf]
    %v33 = vld [vmem:[%s2] sm:$0x1]
    %v34 = vld [vmem:[%s3] sm:$0x1]
    %v35 = vstv %s31
    %v36 = vmul.f32 %v35, %v32
    %v37 = vtanh.pop %v36
    %v39 = vlaneseq
    %v40 = vshrl.u32 %v39, 7
    %v41 = vsub.s32 0, %v40
    %v42 = vrot.slane %v33, %v41
    %v44 = vmul.f32 %v37, %v42
    %v46 = vlaneseq
    %v47 = vshrl.u32 %v46, 7
    %v48 = vsub.s32 0, %v47
    %v49 = vrot.slane %v34, %v48
    %v51 = vadd.f32 %v44, %v49
    %52 = vst [vmem:[#allocation6] sm:$0xf] %v51
    // Predicated region
    $region22: #{tpu_custom_call.1} parent=1 // pred_check
      _
    $region23: #{tpu_custom_call.1} parent=1 // pred_check_branch
      %54 = sbr.rel (0) target = $region25
    $region24: #{tpu_custom_call.1} parent=1 // pred_region
      %s56 = ssub.s32 64, 64
      %57 = vsyncadd [#allocation5], %s56
      %s59 = sshll.u32 [#allocation6], 4
      %s60 = int_to_ptr.vmem [resolvable:$true] %s59
      %62 = dma.vmem_to_hbm [thread:$0]  %s60, 64, %s4, [#allocation5]
    $region25: #{tpu_custom_call.1} parent=1 // pred_fallthru
      _
    // Predicated region
    $region26: #{tpu_custom_call.1} parent=1 // pred_check
      _
    $region27: #{tpu_custom_call.1} parent=1 // pred_check_branch
      %64 = sbr.rel (0) target = $region29
    $region28: #{tpu_custom_call.1} parent=1 // pred_region
      %65 = dma.done [#allocation5], 64
    $region29: #{tpu_custom_call.1} parent=1 // pred_fallthru
      _
    %66 = vsyncpa [#allocation4], 1
    %67 = vsyncpa [#allocation5], 1

</llo_original>
